<compile_context>
chip_gen: v7x
topology: tpu7x:2x2x1
jax: 0.10.0
libtpu: 0.0.40
codegen_flags: <defaults>
</compile_context>

<pallas_src>
import functools

import jax
import jax.numpy as jnp
from jax.experimental import pallas as pl
from jax.experimental.pallas import tpu as pltpu

LANES = 128
SUBLANES = 8
TILE_BYTES = 2 * 1024 * 1024     # per-input HBM block target per grid step
CHUNK_BYTES = 32 * 1024          # per-inner-chunk f32 working set (vreg friendly)


def _f32(v):
    # Only insert a cast when needed (keeps the VPU slot clean for f32 inputs).
    return v if v.dtype == jnp.float32 else v.astype(jnp.float32)


def _rup(v, m):
    return (v + m - 1) // m * m


def _pick_tiling(n_rows, n_cols, itemsize):
    """Pick (tile_rows, chunk_rows): tile ~TILE_BYTES of HBM per input block,
    chunk ~CHUNK_BYTES of f32 working set, chunk divides tile."""
    row_bytes_in = n_cols * itemsize
    row_bytes_f32 = n_cols * 4
    if n_rows * row_bytes_in <= TILE_BYTES or n_rows <= SUBLANES:
        tile_rows = n_rows
    else:
        tile_rows = max(
            SUBLANES,
            min(n_rows, max(1, TILE_BYTES // row_bytes_in)) // SUBLANES * SUBLANES)
    chunk_rows = min(
        tile_rows,
        max(SUBLANES, max(1, CHUNK_BYTES // row_bytes_f32) // SUBLANES * SUBLANES))
    if chunk_rows <= 0 or tile_rows % chunk_rows != 0:
        chunk_rows = (SUBLANES
                      if (tile_rows >= SUBLANES and tile_rows % SUBLANES == 0)
                      else tile_rows)
    return tile_rows, chunk_rows


def _accum_tile(x_ref, t_ref, w_ref, acc_ref, row0, *, tile_rows, chunk_rows,
                total_rows, masked):
    """Stream one (tile_rows, n_cols) tile through the small accumulator."""
    n_cols = acc_ref.shape[-1]
    if masked:
        iota = jax.lax.broadcasted_iota(jnp.int32, (chunk_rows, n_cols), 0)
    # Statically unrolled chunk loop: static ref slices, pure VPU work.
    for r0 in range(0, tile_rows, chunk_rows):
        d = (_f32(x_ref[r0:r0 + chunk_rows, :])
             - _f32(t_ref[r0:r0 + chunk_rows, :]))
        dd = d * d
        if w_ref is not None:
            # w block is (chunk, n_cols) or (chunk, 1) -> lane-broadcast here.
            dd = dd * _f32(w_ref[r0:r0 + chunk_rows, :])
        if masked:
            dd = jnp.where((row0 + r0) + iota < total_rows, dd, 0.0)
        acc_ref[...] += dd


def _reduce_step(x_ref, t_ref, w_ref, o_ref, acc_ref, *, tiles_per_core,
                 tile_rows, chunk_rows, total_rows, need_mask):
    p = pl.program_id(0)
    t = pl.program_id(1)

    @pl.when(t == 0)
    def _init():
        acc_ref[...] = jnp.zeros_like(acc_ref)

    row0 = (p * tiles_per_core + t) * tile_rows
    kw = dict(tile_rows=tile_rows, chunk_rows=chunk_rows, total_rows=total_rows)

    if need_mask:
        # Only the globally last tile can overhang: full tiles take the
        # unmasked path and pay zero mask cost.
        is_full = row0 + tile_rows <= total_rows

        @pl.when(is_full)
        def _full_tile():
            _accum_tile(x_ref, t_ref, w_ref, acc_ref, row0, masked=False, **kw)

        @pl.when(jnp.logical_not(is_full))
        def _partial_tile():
            _accum_tile(x_ref, t_ref, w_ref, acc_ref, row0, masked=True, **kw)
    else:
        _accum_tile(x_ref, t_ref, w_ref, acc_ref, row0, masked=False, **kw)

    @pl.when(t == tiles_per_core - 1)
    def _finalize():
        # Single cross-lane reduction + single lane-dense store per core.
        o_ref[...] = jnp.full(o_ref.shape, jnp.sum(acc_ref[...]), jnp.float32)


def _sq_sum_kernel(x_ref, t_ref, o_ref, acc_ref, **static):
    _reduce_step(x_ref, t_ref, None, o_ref, acc_ref, **static)


def _wsq_sum_kernel(x_ref, t_ref, w_ref, o_ref, acc_ref, **static):
    _reduce_step(x_ref, t_ref, w_ref, o_ref, acc_ref, **static)


def _pallas_sq_sum(x2d, t2d, w2d):
    """Sum of (x - t)^2 [* w] over a 2-D slab via a tiled Pallas reduction."""
    n_rows, n_cols = x2d.shape
    tile_rows, chunk_rows = _pick_tiling(n_rows, n_cols, x2d.dtype.itemsize)
    tiles_total = pl.cdiv(n_rows, tile_rows)

    # Leading "parallel" axis only when it is an exact, non-trivial split
    # (>= 2 real tiles per core); otherwise it would just be a serial loop
    # with redundant steps on 1-TC chips.
    p_split = 2 if (tiles_total >= 4 and tiles_total % 2 == 0) else 1
    tiles_per_core = tiles_total // p_split
    need_mask = tiles_total * tile_rows > n_rows   # only the global last tile

    def data_idx(p, t):
        return (p * tiles_per_core + t, 0)

    data_spec = pl.BlockSpec((tile_rows, n_cols), data_idx)
    out_spec = pl.BlockSpec((1, SUBLANES, LANES), lambda p, t: (p, 0, 0))

    static = dict(tiles_per_core=tiles_per_core, tile_rows=tile_rows,
                  chunk_rows=chunk_rows, total_rows=n_rows, need_mask=need_mask)

    def block_bytes(cols, dt):
        return _rup(tile_rows, SUBLANES) * _rup(cols, LANES) * jnp.dtype(dt).itemsize

    vmem_need = 2 * (block_bytes(n_cols, x2d.dtype) + block_bytes(n_cols, t2d.dtype))
    if w2d is None:
        kernel = functools.partial(_sq_sum_kernel, **static)
        in_specs = [data_spec, data_spec]
        operands = (x2d, t2d)
    else:
        w_cols = w2d.shape[1]
        kernel = functools.partial(_wsq_sum_kernel, **static)
        in_specs = [data_spec, data_spec,
                    pl.BlockSpec((tile_rows, w_cols), data_idx)]
        operands = (x2d, t2d, w2d)
        vmem_need += 2 * block_bytes(w_cols, w2d.dtype)
    vmem_need += _rup(chunk_rows, SUBLANES) * _rup(n_cols, LANES) * 4   # accumulator
    vmem_limit = int(min(96 << 20, max(32 << 20, vmem_need + (8 << 20))))

    partials = pl.pallas_call(
        kernel,
        out_shape=jax.ShapeDtypeStruct((p_split, SUBLANES, LANES), jnp.float32),
        grid_spec=pltpu.PrefetchScalarGridSpec(
            num_scalar_prefetch=0,
            grid=(p_split, tiles_per_core),
            in_specs=in_specs,
            out_specs=out_spec,
            scratch_shapes=[pltpu.VMEM((chunk_rows, n_cols), jnp.float32)],
        ),
        compiler_params=pltpu.CompilerParams(
            # TODO(synk): on v7x verify that "parallel" shards the leading axis
            # across the two TensorCores; if not, switch it to CORE_PARALLEL.
            dimension_semantics=("parallel", "arbitrary"),
            vmem_limit_bytes=vmem_limit),
    )(*operands)

    # One scalar per (logical) core; trivial final combine in the wrapper.
    return jnp.sum(partials[:, 0, 0])


def _rowwise_weights(inputs, w):
    """If `w` broadcasts only over the (N, C) leading axes of 4-D NCHW inputs,
    return the tiny (N*C, 1) f32 per-row weight column; else None."""
    if inputs.ndim != 4 or w.ndim > 4:
        return None
    shape4 = (1,) * (4 - w.ndim) + tuple(w.shape)
    if shape4[2] != 1 or shape4[3] != 1:
        return None
    N, C = inputs.shape[0], inputs.shape[1]
    if shape4[0] not in (1, N) or shape4[1] not in (1, C):
        return None
    w_nc = jnp.broadcast_to(
        w.reshape(shape4)[:, :, 0, 0].astype(jnp.float32), (N, C))
    return w_nc.reshape(N * C, 1)


def _sq_sum_flat(inputs, targets, w_full):
    """Lane-dense (rows, 128) streaming reduction; the (<128-element) ragged
    tail is folded in with plain JAX instead of padding the whole tensor."""
    xf = inputs.reshape(-1)
    tf = targets.reshape(-1)
    wf = None if w_full is None else w_full.reshape(-1)
    n = xf.shape[0]
    n_main = (n // LANES) * LANES
    total = jnp.float32(0.0)
    if n_main > 0:
        def lane2d(v):
            v = v if n_main == n else jax.lax.slice(v, (0,), (n_main,))
            return v.reshape(n_main // LANES, LANES)
        total = _pallas_sq_sum(lane2d(xf), lane2d(tf),
                               None if wf is None else lane2d(wf))
    if n_main < n:
        d = _f32(xf[n_main:]) - _f32(tf[n_main:])
        dd = d * d
        if wf is not None:
            dd = dd * _f32(wf[n_main:])
        total = total + jnp.sum(dd)
    return total


def custom_mse_loss(inputs, targets, weights=None):
    """Replicates CustomMSELoss.forward: mean of (optionally weighted) sq error."""
    assert inputs.shape == targets.shape
    n_elem = inputs.size
    out_dtype = jnp.result_type(inputs.dtype, targets.dtype)

    w = None
    scale = None
    if weights is not None:
        w = jnp.asarray(weights)
        if hasattr(weights, "dtype"):
            out_dtype = jnp.result_type(out_dtype, w.dtype)
        if w.size == 1:
            # Scalar weight: fold into the final scale -- zero extra HBM traffic.
            scale = _f32(w.reshape(()))
            w = None

    total = None
    if w is not None and inputs.ndim == 4:
        w_rows = _rowwise_weights(inputs, w)
        if w_rows is not None:
            N, C, H, W = inputs.shape
            NC, HW = N * C, H * W
            # Keep the in-kernel chunk/accumulator size sane for very wide rows.
            if SUBLANES * HW * 4 <= TILE_BYTES:
                total = _pallas_sq_sum(inputs.reshape(NC, HW),
                                       targets.reshape(NC, HW), w_rows)

    if total is None:
        if w is None:
            total = _sq_sum_flat(inputs, targets, None)
        else:
            # Generic broadcastable weights: stream the materialized broadcast
            # in the *weights* dtype (no f32 upcast in HBM).
            # TODO(synk): weights broadcasting along trailing/lane axes could
            # also be streamed small instead of materialized.
            total = _sq_sum_flat(inputs, targets,
                                 jnp.broadcast_to(w, inputs.shape))

    if scale is not None:
        total = total * scale
    return (total / jnp.float32(n_elem)).astype(out_dtype)


if __name__ == "__main__":
    key = jax.random.PRNGKey(0)
    k1, k2, k3, k4 = jax.random.split(key, 4)

    # Small NCHW-style shapes consistent with an autoencoder loss.
    shape = (2, 4, 16, 16)
    inputs = jax.random.normal(k1, shape, dtype=jnp.float32)
    targets = jax.random.normal(k2, shape, dtype=jnp.float32)
    # Per-channel weights, broadcastable like in PyTorch (rowwise fast path).
    weights_c = jax.random.uniform(k3, (1, 4, 1, 1), dtype=jnp.float32) + 0.5
    # Full-shape weights (exercises the generic streamed-weights path).
    weights_full = jax.random.uniform(k4, shape, dtype=jnp.float32) + 0.5

    loss_unweighted = custom_mse_loss(inputs, targets)
    loss_channel = custom_mse_loss(inputs, targets, weights=weights_c)
    loss_full = custom_mse_loss(inputs, targets, weights=weights_full)
    loss_scalar = custom_mse_loss(inputs, targets, weights=jnp.float32(0.25))
    jax.block_until_ready((loss_unweighted, loss_channel, loss_full, loss_scalar))

    # Reference checks in plain JAX (same semantics as the PyTorch module).
    ref_unweighted = jnp.mean((inputs - targets) ** 2)
    ref_channel = jnp.mean(((inputs - targets) ** 2) * weights_c)
    ref_full = jnp.mean(((inputs - targets) ** 2) * weights_full)
    ref_scalar = jnp.mean(((inputs - targets) ** 2) * 0.25)
    assert jnp.allclose(loss_unweighted, ref_unweighted, rtol=1e-5, atol=1e-6)
    assert jnp.allclose(loss_channel, ref_channel, rtol=1e-5, atol=1e-6)
    assert jnp.allclose(loss_full, ref_full, rtol=1e-5, atol=1e-6)
    assert jnp.allclose(loss_scalar, ref_scalar, rtol=1e-5, atol=1e-6)

    print("KERNEL_OK")
</pallas_src>

<mosaic_0001>
module attributes {stable_mosaic.version = 11 : i64} {
  func.func @_sq_sum_kernel(%arg0: i32, %arg1: i32, %arg2: memref<16x128xf32, #tpu.memory_space<vmem>>, %arg3: memref<16x128xf32, #tpu.memory_space<vmem>>, %arg4: memref<1x8x128xf32, #tpu.memory_space<vmem>>, %arg5: memref<16x128xf32, #tpu.memory_space<vmem>>) attributes {dimension_semantics = [#tpu.dimension_semantics<parallel>, #tpu.dimension_semantics<arbitrary>], iteration_bounds = array<i64: 1, 1>, scalar_prefetch = 0 : i64, scratch_operands = 1 : i64, tpu.core_type = #tpu.core_type<tc>, window_params = [{transform_indices = @transform_0, window_bounds = array<i64: 16, 128>}, {transform_indices = @transform_1, window_bounds = array<i64: 16, 128>}, {transform_indices = @transform_2, window_bounds = array<i64: 1, 8, 128>}]} {
    %c0_i32 = arith.constant 0 : i32
    %0 = arith.cmpi eq, %arg1, %c0_i32 : i32
    %1 = arith.extui %0 : i1 to i32
    %c0_i32_0 = arith.constant 0 : i32
    %2 = arith.cmpi ne, %1, %c0_i32_0 : i32
    scf.if %2 {
      %cst = arith.constant 0.000000e+00 : f32
      %13 = vector.broadcast %cst : f32 to vector<16x128xf32>
      %c0_10 = arith.constant 0 : index
      %c0_11 = arith.constant 0 : index
      %14 = vector.load %arg5[%c0_10, %c0_11] : memref<16x128xf32, #tpu.memory_space<vmem>>, vector<16x128xf32>
      tpu.vector_store %arg5[%c0_10, %c0_11], %13 {strides = array<i32>} : memref<16x128xf32, #tpu.memory_space<vmem>>, vector<16x128xf32>,
    } else {
    }
    %c0 = arith.constant 0 : index
    %c0_1 = arith.constant 0 : index
    %3 = vector.load %arg2[%c0, %c0_1] : memref<16x128xf32, #tpu.memory_space<vmem>>, vector<16x128xf32>
    %c0_2 = arith.constant 0 : index
    %c0_3 = arith.constant 0 : index
    %4 = vector.load %arg3[%c0_2, %c0_3] : memref<16x128xf32, #tpu.memory_space<vmem>>, vector<16x128xf32>
    %5 = arith.subf %3, %4 : vector<16x128xf32>
    %6 = arith.mulf %5, %5 : vector<16x128xf32>
    %c0_4 = arith.constant 0 : index
    %c0_5 = arith.constant 0 : index
    %7 = vector.load %arg5[%c0_4, %c0_5] : memref<16x128xf32, #tpu.memory_space<vmem>>, vector<16x128xf32>
    %8 = arith.addf %7, %6 : vector<16x128xf32>
    %c0_6 = arith.constant 0 : index
    %c0_7 = arith.constant 0 : index
    %9 = vector.load %arg5[%c0_6, %c0_7] : memref<16x128xf32, #tpu.memory_space<vmem>>, vector<16x128xf32>
    tpu.vector_store %arg5[%c0_6, %c0_7], %8 {strides = array<i32>} : memref<16x128xf32, #tpu.memory_space<vmem>>, vector<16x128xf32>,
    %c0_i32_8 = arith.constant 0 : i32
    %10 = arith.cmpi eq, %arg1, %c0_i32_8 : i32
    %11 = arith.extui %10 : i1 to i32
    %c0_i32_9 = arith.constant 0 : i32
    %12 = arith.cmpi ne, %11, %c0_i32_9 : i32
    scf.if %12 {
      %c0_10 = arith.constant 0 : index
      %c0_11 = arith.constant 0 : index
      %13 = vector.load %arg5[%c0_10, %c0_11] : memref<16x128xf32, #tpu.memory_space<vmem>>, vector<16x128xf32>
      %14 = vector.shape_cast %13 : vector<16x128xf32> to vector<1x16x128xf32>
      %cst = arith.constant dense<0.000000e+00> : vector<1xf32>
      %15 = vector.multi_reduction <add>, %14, %cst [1, 2] : vector<1x16x128xf32> to vector<1xf32>
      %16 = vector.shape_cast %15 : vector<1xf32> to vector<1x1x1xf32>
      %17 = vector.extract %16[0, 0, 0] : f32 from vector<1x1x1xf32>
      %18 = vector.broadcast %17 : f32 to vector<1x8x128xf32>
      %c0_12 = arith.constant 0 : index
      %c0_13 = arith.constant 0 : index
      %c0_14 = arith.constant 0 : index
      %19 = vector.load %arg4[%c0_12, %c0_13, %c0_14] : memref<1x8x128xf32, #tpu.memory_space<vmem>>, vector<1x8x128xf32>
      tpu.vector_store %arg4[%c0_12, %c0_13, %c0_14], %18 {strides = array<i32>} : memref<1x8x128xf32, #tpu.memory_space<vmem>>, vector<1x8x128xf32>,
    } else {
    }
    return
  }
  func.func @transform_0(%arg0: i32, %arg1: i32) -> (i32, i32) {
    %c1_i32 = arith.constant 1 : i32
    %0 = arith.muli %arg0, %c1_i32 : i32
    %1 = arith.addi %0, %arg1 : i32
    %c0_i32 = arith.constant 0 : i32
    %c0_i32_0 = arith.constant 0 : i32
    return %1, %c0_i32 : i32, i32
  }
  func.func @transform_1(%arg0: i32, %arg1: i32) -> (i32, i32) {
    %c1_i32 = arith.constant 1 : i32
    %0 = arith.muli %arg0, %c1_i32 : i32
    %1 = arith.addi %0, %arg1 : i32
    %c0_i32 = arith.constant 0 : i32
    %c0_i32_0 = arith.constant 0 : i32
    return %1, %c0_i32 : i32, i32
  }
  func.func @transform_2(%arg0: i32, %arg1: i32) -> (i32, i32, i32) {
    %c0_i32 = arith.constant 0 : i32
    %c0_i32_0 = arith.constant 0 : i32
    %c0_i32_1 = arith.constant 0 : i32
    return %arg0, %c0_i32, %c0_i32_0 : i32, i32, i32
  }
}

</mosaic_0001>

<llo_original>
// kernel: tpu_custom_call.1
$region0: #{tpu_custom_call.1}
  #allocation0 [shape = 'u32[]', space=smem, size = 0x4, offset = 0x4, fixed_abs, tag = 'smem constant byte address 0x4 - core index']
  #allocation1 [shape = 'u32[144,128]{1,0:T(1,128)}', space=vmem, size = 0x12000, scoped, tag = 'internal scratch']
  #allocation2 [shape = 'f32[16,128]{1,0:T(8,128)}', space=vmem, size = 0x2000, scoped, tag = 'scratch operand']
  %s0 = inlined_call_operand.hbm [shape: f32[16,128], index: 0, kind: input, shape index: {}]
  %s1 = inlined_call_operand.hbm [shape: f32[16,128], index: 1, kind: input, shape index: {}]
  %s2 = inlined_call_operand.hbm [shape: f32[1,8,128], index: 2, kind: output, shape index: {}]
  %s3 = sld [smem:[#allocation0]]
  $region34: #{tpu_custom_call.1} parent=0
    _
  %s5 = ssub.s32 1, %s3
  %s6 = scalar_select 0, %s5, %s3
  $region1: #{tpu_custom_call.1} parent=0
    #allocation3 [shape = 'u8[8192]{0}', space=vmem, size = 0x2000, scoped, tag = 'input window, operand 0, single buffered']
    #allocation4 [shape = 's32[1]{0}', space=sflag, size = 0x4, scoped, tag = 'scoped memory for tpu_custom_call.1']
    #allocation5 [shape = 's32[1]{0}', space=sflag, size = 0x4, scoped, tag = 'scoped memory for tpu_custom_call.1']
    #allocation6 [shape = 'u8[8192]{0}', space=vmem, size = 0x2000, scoped, tag = 'input window, operand 1, single buffered']
    #allocation7 [shape = 's32[1]{0}', space=sflag, size = 0x4, scoped, tag = 'scoped memory for tpu_custom_call.1']
    #allocation8 [shape = 'u8[4096]{0}', space=vmem, size = 0x1000, scoped, tag = 'output window, operand 0, single buffered']
    %7 = vsyncpa [#allocation4], 0
    %8 = vsyncpa [#allocation7], 0
    %9 = vsyncpa [#allocation5], 0
    // Predicated region
    $region2: #{tpu_custom_call.1} parent=1 // pred_check
      _
    $region3: #{tpu_custom_call.1} parent=1 // pred_check_branch
      %11 = sbr.rel (0) target = $region5
    $region4: #{tpu_custom_call.1} parent=1 // pred_region
      %s12 = sadd.s32 0, 0
      %s13 = smul.u32 2, %s12
      %s15 = ssub.s32 256, 256
      %16 = vsyncadd [#allocation4], %s15
      %s17 = smul.addr %s13, 128
      %s18 = scalar_lea.hbm %s0, %s17
      %s19 = sshll.u32 [#allocation3], 4
      %s20 = int_to_ptr.vmem [resolvable:$true] %s19
      %25 = dma.hbm_to_vmem [thread:$0]  %s18, 256, %s20, [#allocation4], 128, 128, 8
    $region5: #{tpu_custom_call.1} parent=1 // pred_fallthru
      _
    // Predicated region
    $region6: #{tpu_custom_call.1} parent=1 // pred_check
      _
    $region7: #{tpu_custom_call.1} parent=1 // pred_check_branch
      %27 = sbr.rel (0) target = $region9
    $region8: #{tpu_custom_call.1} parent=1 // pred_region
      %s28 = sadd.s32 0, 0
      %s29 = smul.u32 2, %s28
      %s31 = ssub.s32 256, 256
      %32 = vsyncadd [#allocation7], %s31
      %s33 = smul.addr %s29, 128
      %s34 = scalar_lea.hbm %s1, %s33
      %s35 = sshll.u32 [#allocation6], 4
      %s36 = int_to_ptr.vmem [resolvable:$true] %s35
      %41 = dma.hbm_to_vmem [thread:$0]  %s34, 256, %s36, [#allocation7], 128, 128, 8
    $region9: #{tpu_custom_call.1} parent=1 // pred_fallthru
      _
    // Predicated region
    $region10: #{tpu_custom_call.1} parent=1 // pred_check
      _
    $region11: #{tpu_custom_call.1} parent=1 // pred_check_branch
      %43 = sbr.rel (0) target = $region13
    $region12: #{tpu_custom_call.1} parent=1 // pred_region
      %44 = dma.done [#allocation4], 256
    $region13: #{tpu_custom_call.1} parent=1 // pred_fallthru
      _
    // Predicated region
    $region14: #{tpu_custom_call.1} parent=1 // pred_check
      _
    $region15: #{tpu_custom_call.1} parent=1 // pred_check_branch
      %46 = sbr.rel (0) target = $region17
    $region16: #{tpu_custom_call.1} parent=1 // pred_region
      %47 = dma.done [#allocation7], 256
    $region17: #{tpu_custom_call.1} parent=1 // pred_fallthru
      _
    %s48 = sadd.s32 0, 0
    %s49 = smul.u32 2, %s48
    %s50 = sadd.s32 0, 0
    %s51 = smul.u32 2, %s50
    %p52 = scmp.eq.s32.totalorder 0, 0
    // Predicated region
    $region18: #{tpu_custom_call.1} parent=1 // pred_check
      %p53 = pneg %p52
    $region19: #{tpu_custom_call.1} parent=1 // pred_check_branch
      %55 = sbr.rel (%p53) target = $region21
    $region20: #{tpu_custom_call.1} parent=1 // pred_region
      %56 = vst [vmem:[#allocation2] sm:$0xff] 0.0
      %57 = vst [vmem:[#allocation2 + $0x8] sm:$0xff] 0.0
    $region21: #{tpu_custom_call.1} parent=1 // pred_fallthru
      _
    %v58 = vld [vmem:[#allocation3] sm:$0xff]
    %v59 = vld [vmem:[#allocation3 + $0x8] sm:$0xff]
    %v60 = vld [vmem:[#allocation6] sm:$0xff]
    %v61 = vld [vmem:[#allocation6 + $0x8] sm:$0xff]
    %v62 = vsub.f32 %v58, %v60
    %v63 = vsub.f32 %v59, %v61
    %v64 = vmul.f32 %v62, %v62
    %v65 = vmul.f32 %v63, %v63
    %v66 = vld [vmem:[#allocation2] sm:$0xff]
    %v67 = vld [vmem:[#allocation2 + $0x8] sm:$0xff]
    %v68 = vadd.f32 %v66, %v64
    %v69 = vadd.f32 %v67, %v65
    %70 = vst [vmem:[#allocation2] sm:$0xff] %v68
    %71 = vst [vmem:[#allocation2 + $0x8] sm:$0xff] %v69
    // Predicated region
    $region22: #{tpu_custom_call.1} parent=1 // pred_check
      %p72 = pneg %p52
    $region23: #{tpu_custom_call.1} parent=1 // pred_check_branch
      %74 = sbr.rel (%p72) target = $region25
    $region24: #{tpu_custom_call.1} parent=1 // pred_region
      %v75 = vld [vmem:[#allocation2] sm:$0xff]
      %v76 = vld [vmem:[#allocation2 + $0x8] sm:$0xff]
      %v77 = vadd.f32 %v75, %v76
      %78 = vadd.xlane.f32.xlu0 %v77
      %v79 = vpop.xlane.xlu0 %78
      %v80 = vrot.slane %v79, 4
      %v81 = vadd.f32 %v79, %v80
      %v82 = vrot.slane %v81, 2
      %v83 = vadd.f32 %v81, %v82
      %v84 = vrot.slane %v83, 1
      %v85 = vadd.f32 %v83, %v84
      %s86 = vtos %v85
      %v87 = vstv %s86
      %88 = vst [vmem:[#allocation8] sm:$0xff] %v87
    $region25: #{tpu_custom_call.1} parent=1 // pred_fallthru
      _
    // Predicated region
    $region26: #{tpu_custom_call.1} parent=1 // pred_check
      _
    $region27: #{tpu_custom_call.1} parent=1 // pred_check_branch
      %90 = sbr.rel (0) target = $region29
    $region28: #{tpu_custom_call.1} parent=1 // pred_region
      %s92 = ssub.s32 128, 128
      %93 = vsyncadd [#allocation5], %s92
      %s95 = sshll.u32 [#allocation8], 4
      %s96 = int_to_ptr.vmem [resolvable:$true] %s95
      %98 = dma.vmem_to_hbm [thread:$0]  %s96, 128, %s2, [#allocation5]
    $region29: #{tpu_custom_call.1} parent=1 // pred_fallthru
      _
    // Predicated region
    $region30: #{tpu_custom_call.1} parent=1 // pred_check
      _
    $region31: #{tpu_custom_call.1} parent=1 // pred_check_branch
      %100 = sbr.rel (0) target = $region33
    $region32: #{tpu_custom_call.1} parent=1 // pred_region
      %101 = dma.done [#allocation5], 128
    $region33: #{tpu_custom_call.1} parent=1 // pred_fallthru
      _
    %102 = vsyncpa [#allocation4], 1
    %103 = vsyncpa [#allocation7], 1
    %104 = vsyncpa [#allocation5], 1

</llo_original>
